<compile_context>
chip_gen: v6e
topology: v6e:2x2x1
jax: 0.10.0
libtpu: 0.0.40
codegen_flags: <defaults>
</compile_context>

<pallas_src>
import functools
import math
from collections import Counter

import jax
import jax.numpy as jnp
import numpy as np
from jax.experimental import pallas as pl
from jax.experimental.pallas import tpu as pltpu


def _round_up(v, m):
    return ((v + m - 1) // m) * m


def _mmd_tile_kernel(scale_ref, rs_ref, cs_ref, wr_ref, wc_ref, zr_ref,
                     zct_ref, out_ref, *, pow2_counts, gen_exps):
    """One (TILE, TILE) tile of the RBF kernel matrix, reduced to a weighted
    (1, TILE) partial sum accumulated into this row-tile's output block.
    Only upper-triangle tiles (j >= i) are computed; off-diagonal tiles are
    counted twice (K is symmetric)."""
    i = pl.program_id(0)
    j = pl.program_id(1)

    @pl.when(j == 0)
    def _init():
        out_ref[...] = jnp.zeros_like(out_ref)

    @pl.when(j >= i)
    def _compute():
        # Gram tile in canonical (M, K) @ (K, N) form -> no RHS transpose.
        gram = jax.lax.dot_general(
            zr_ref[...], zct_ref[...], (((1,), (0,)), ((), ())),
            preferred_element_type=jnp.float32)                 # (TM, TN) f32

        l2 = jnp.maximum(rs_ref[...] + cs_ref[...] - 2.0 * gram, 0.0)

        scale0 = scale_ref[0, 0]            # -1 / (bandwidth * m_max)

        if pow2_counts is not None:
            # exp(-l2/(b*m)) = e^(m_max/m) with e = exp(-l2/(b*m_max)); all
            # exponents are powers of two -> one exp + repeated squaring (VPU).
            e = jnp.exp(l2 * scale0)
            k = None
            cur = e
            counts = dict(pow2_counts)
            max_lg = max(counts)
            for lg in range(max_lg + 1):
                c = counts.get(lg, 0)
                if c:
                    term = cur if c == 1 else cur * float(c)
                    k = term if k is None else k + term
                if lg != max_lg:
                    cur = cur * cur
        else:
            # general multipliers: one exp per kernel (static unroll).
            k = None
            for p in gen_exps:              # p = m_max / m_i (static)
                term = jnp.exp(l2 * (scale0 * p))
                k = term if k is None else k + term

        # Weighted quadrant sum on the MXU:  (1, TM) @ (TM, TN) matvec, then
        # scale by the column weights.  Off-diagonal tiles count twice.
        part = jax.lax.dot_general(
            wr_ref[...], k, (((1,), (0,)), ((), ())),
            preferred_element_type=jnp.float32) * wc_ref[...]   # (1, TN)
        sym = jnp.where(j > i, jnp.float32(2.0), jnp.float32(1.0))
        out_ref[...] += (sym * part)[None, :, :]


def mmd_loss(x, y, n_kernels=5, mul_factor=2.0, bandwidth=None,
             tile=512, use_bf16_gram=True):
    """MMD loss between X (nx, d) and Y (ny, d); returns a float32 scalar.

    use_bf16_gram=True runs the Gram matmul in bf16 on the MXU (native on
    v5e/v6e/v7x) with f32 accumulation; set False for exact f32 semantics.
    """
    x = jnp.asarray(x, jnp.float32)
    y = jnp.asarray(y, jnp.float32)
    assert x.ndim == 2 and y.ndim == 2 and x.shape[1] == y.shape[1]
    nx, d = x.shape
    ny = y.shape[0]
    n_total = nx + ny

    # --- static kernel-multiplier setup -------------------------------------
    multipliers = [float(mul_factor) ** (i - n_kernels // 2)
                   for i in range(n_kernels)]
    m_max = max(multipliers)
    exps = [m_max / m for m in multipliers]          # all >= 1

    def _int_log2(v):
        lg = math.log2(v)
        r = int(round(lg))
        return r if (r >= 0 and abs(lg - r) < 1e-9) else None

    lgs = [_int_log2(p) for p in exps]
    if all(lg is not None for lg in lgs):
        pow2_counts = tuple(sorted(Counter(lgs).items()))
        gen_exps = ()
    else:
        pow2_counts = None
        gen_exps = tuple(exps)

    # --- tile / padding geometry, keyed off the actual VMEM capacity --------
    d_pad = _round_up(d, 128)
    elt = 2 if use_bf16_gram else 4
    try:
        vmem_cap = int(pltpu.get_tpu_info().vmem_capacity_bytes)
    except Exception:
        vmem_cap = 64 * 1024 * 1024        # conservative (v7x per-TensorCore)

    def _budget(t):
        # 2 z streams x 2 pipeline buffers + ~6 (TM,TN) f32 intermediates.
        return 2 * 2 * t * d_pad * elt + 6 * t * t * 4

    cap = int(0.55 * vmem_cap)
    single = _round_up(max(n_total, 16), 16)
    if n_total <= tile and _budget(single) <= cap:
        tile = single                       # single tile; block == full array
    else:
        tile = max(128, (min(tile, 512) // 128) * 128)
        while tile > 128 and _budget(tile) > cap:
            tile //= 2
    n_pad = _round_up(n_total, tile)
    num_i = n_pad // tile                   # row tiles == col tiles

    # --- stacked & zero-padded input (padding rows/cols are zeros) ----------
    z = jnp.zeros((n_pad, d_pad), jnp.float32)
    z = z.at[:nx, :d].set(x)
    z = z.at[nx:n_total, :d].set(y)

    sq = jnp.sum(z * z, axis=1)             # (n_pad,) padding rows -> 0

    # --- bandwidth, closed form (== bandwidth=None branch of the RBF) -------
    if bandwidth is None:
        s_total = jnp.sum(sq)
        col_sum = jnp.sum(z, axis=0)
        sum_l2 = 2.0 * n_total * s_total - 2.0 * jnp.dot(col_sum, col_sum)
        bw = sum_l2 / float(n_total * n_total - n_total)
    else:
        bw = jnp.float32(bandwidth)
    scale0 = (-1.0 / (bw * m_max)).astype(jnp.float32).reshape(1, 1)

    # --- matmul operands: cast once in the wrapper, pre-transpose once ------
    mm_dtype = jnp.bfloat16 if use_bf16_gram else jnp.float32
    z_mm = z.astype(mm_dtype)               # (n_pad, d_pad) row tiles
    zt_mm = z_mm.T                          # (d_pad, n_pad) col tiles (MXU RHS)

    # --- quadrant weights: loss = sum_ij w_i w_j K_ij ------------------------
    w = np.concatenate([np.full((nx,), 1.0 / nx, np.float32),
                        np.full((ny,), -1.0 / ny, np.float32),
                        np.zeros((n_pad - n_total,), np.float32)])
    w_vec = jnp.asarray(w.reshape(1, n_pad))
    row_sq = sq.reshape(n_pad, 1)
    col_sq = sq.reshape(1, n_pad)

    kernel = functools.partial(
        _mmd_tile_kernel, pow2_counts=pow2_counts, gen_exps=gen_exps)

    # Cost hint for XLA's scheduler (upper-triangle tiles only).
    steps_ut = num_i * (num_i + 1) // 2
    cost = pl.CostEstimate(
        flops=int(steps_ut * (2 * tile * tile * d_pad + 14 * tile * tile)),
        transcendentals=int(steps_ut * tile * tile),
        bytes_accessed=int((num_i + steps_ut) * tile * d_pad * elt
                           + num_i * tile * 16),
    )

    # Col-side index map clamped to max(i, j): lower-triangle steps (skipped
    # by pl.when) keep the same resident col block -> no extra DMA.
    col_block = lambda i, j: (0, jnp.maximum(i, j))

    partials = pl.pallas_call(
        kernel,
        grid=(num_i, num_i),
        in_specs=[
            pl.BlockSpec(memory_space=pltpu.MemorySpace.SMEM),     # scale0
            pl.BlockSpec((tile, 1), lambda i, j: (i, 0)),          # row ||.||^2
            pl.BlockSpec((1, tile), col_block),                    # col ||.||^2
            pl.BlockSpec((1, tile), lambda i, j: (0, i)),          # row weights
            pl.BlockSpec((1, tile), col_block),                    # col weights
            pl.BlockSpec((tile, d_pad), lambda i, j: (i, 0)),      # z row tile
            pl.BlockSpec((d_pad, tile), col_block),                # z^T col tile
        ],
        out_specs=pl.BlockSpec((1, 1, tile), lambda i, j: (i, 0, 0)),
        out_shape=jax.ShapeDtypeStruct((num_i, 1, tile), jnp.float32),
        compiler_params=pltpu.CompilerParams(
            dimension_semantics=("parallel", "arbitrary"),
            vmem_limit_bytes=int(max(32 * 1024 * 1024,
                                     min(int(0.75 * vmem_cap),
                                         96 * 1024 * 1024))),
        ),
        cost_estimate=cost,
    )(scale0, row_sq, col_sq, w_vec, w_vec, z_mm, zt_mm)

    # tiny final reduce over per-row-tile partials
    return jnp.sum(partials)


def _mmd_reference(x, y, n_kernels=5, mul_factor=2.0):
    """Pure-JAX transliteration of the PyTorch module (sanity check)."""
    z = jnp.concatenate([x, y], axis=0)
    d2 = jnp.sum((z[:, None, :] - z[None, :, :]) ** 2, axis=-1)
    n = z.shape[0]
    bw = jnp.sum(d2) / (n * n - n)
    mults = mul_factor ** (jnp.arange(n_kernels) - n_kernels // 2)
    K = jnp.sum(jnp.exp(-d2[None, ...] / (bw * mults)[:, None, None]), axis=0)
    nxs = x.shape[0]
    return (jnp.mean(K[:nxs, :nxs]) - 2.0 * jnp.mean(K[:nxs, nxs:])
            + jnp.mean(K[nxs:, nxs:]))


if __name__ == "__main__":
    key = jax.random.PRNGKey(0)
    kx, ky = jax.random.split(key)
    # small shapes: 8 samples each, 32 features
    X = jax.random.normal(kx, (8, 32), dtype=jnp.float32)
    Y = jax.random.normal(ky, (8, 32), dtype=jnp.float32) + 0.5

    ref = _mmd_reference(X, Y)

    # exact-semantics path (f32 Gram), tight tolerance
    loss_f32 = mmd_loss(X, Y, use_bf16_gram=False)
    jax.block_until_ready(loss_f32)
    assert bool(jnp.isfinite(loss_f32)), "f32 loss is not finite"
    assert abs(float(loss_f32) - float(ref)) <= 1e-4 + 1e-3 * abs(float(ref)), (
        float(loss_f32), float(ref))

    # fast default path (bf16 Gram on the MXU), looser tolerance
    loss_bf16 = mmd_loss(X, Y)
    jax.block_until_ready(loss_bf16)
    assert bool(jnp.isfinite(loss_bf16)), "bf16 loss is not finite"
    assert abs(float(loss_bf16) - float(ref)) <= 3e-2 + 5e-2 * abs(float(ref)), (
        float(loss_bf16), float(ref))

    print("KERNEL_OK")
</pallas_src>

<mosaic_0001>
module attributes {stable_mosaic.version = 11 : i64} {
  func.func @_mmd_tile_kernel(%arg0: i32, %arg1: i32, %arg2: memref<1x1xf32, #tpu.memory_space<smem>>, %arg3: memref<16x1xf32, #tpu.memory_space<vmem>>, %arg4: memref<1x16xf32, #tpu.memory_space<vmem>>, %arg5: memref<1x16xf32, #tpu.memory_space<vmem>>, %arg6: memref<1x16xf32, #tpu.memory_space<vmem>>, %arg7: memref<16x128xf32, #tpu.memory_space<vmem>>, %arg8: memref<128x16xf32, #tpu.memory_space<vmem>>, %arg9: memref<1x1x16xf32, #tpu.memory_space<vmem>>) attributes {dimension_semantics = [#tpu.dimension_semantics<parallel>, #tpu.dimension_semantics<arbitrary>], iteration_bounds = array<i64: 1, 1>, scalar_prefetch = 0 : i64, scratch_operands = 0 : i64, tpu.core_type = #tpu.core_type<tc>, window_params = [{transform_indices = @transform_0, window_bounds = array<i64: 1, 1>}, {transform_indices = @transform_1, window_bounds = array<i64: 16, 1>}, {transform_indices = @transform_2, window_bounds = array<i64: 1, 16>}, {transform_indices = @transform_3, window_bounds = array<i64: 1, 16>}, {transform_indices = @transform_4, window_bounds = array<i64: 1, 16>}, {transform_indices = @transform_5, window_bounds = array<i64: 16, 128>}, {transform_indices = @transform_6, window_bounds = array<i64: 128, 16>}, {transform_indices = @transform_7, window_bounds = array<i64: 1, 1, 16>}]} {
    %c0_i32 = arith.constant 0 : i32
    %0 = arith.cmpi eq, %arg1, %c0_i32 : i32
    %1 = arith.extui %0 : i1 to i32
    %c0_i32_0 = arith.constant 0 : i32
    %2 = arith.cmpi ne, %1, %c0_i32_0 : i32
    scf.if %2 {
      %cst = arith.constant 0.000000e+00 : f32
      %6 = vector.broadcast %cst : f32 to vector<1x1x16xf32>
      %c0 = arith.constant 0 : index
      %c0_2 = arith.constant 0 : index
      %c0_3 = arith.constant 0 : index
      %7 = vector.load %arg9[%c0, %c0_2, %c0_3] : memref<1x1x16xf32, #tpu.memory_space<vmem>>, vector<1x1x16xf32>
      tpu.vector_store %arg9[%c0, %c0_2, %c0_3], %6 {strides = array<i32>} : memref<1x1x16xf32, #tpu.memory_space<vmem>>, vector<1x1x16xf32>,
    } else {
    }
    %3 = arith.cmpi sge, %arg1, %arg0 : i32
    %4 = arith.extui %3 : i1 to i32
    %c0_i32_1 = arith.constant 0 : i32
    %5 = arith.cmpi ne, %4, %c0_i32_1 : i32
    scf.if %5 {
      %c0 = arith.constant 0 : index
      %c0_2 = arith.constant 0 : index
      %6 = vector.load %arg7[%c0, %c0_2] : memref<16x128xf32, #tpu.memory_space<vmem>>, vector<16x128xf32>
      %c0_3 = arith.constant 0 : index
      %c0_4 = arith.constant 0 : index
      %7 = vector.load %arg8[%c0_3, %c0_4] : memref<128x16xf32, #tpu.memory_space<vmem>>, vector<128x16xf32>
      %cst = arith.constant dense<0.000000e+00> : vector<16x16xf32>
      %8 = tpu.matmul %6, %7, %cst {dimension_numbers = #tpu.dot_dimension_numbers<[1], [0], [0], [1], [0, 0, 1, 1], [], []>} : vector<16x128xf32>, vector<128x16xf32>, vector<16x16xf32> -> vector<16x16xf32>
      %c0_5 = arith.constant 0 : index
      %c0_6 = arith.constant 0 : index
      %9 = vector.load %arg3[%c0_5, %c0_6] : memref<16x1xf32, #tpu.memory_space<vmem>>, vector<16x1xf32>
      %c0_7 = arith.constant 0 : index
      %c0_8 = arith.constant 0 : index
      %10 = vector.load %arg4[%c0_7, %c0_8] : memref<1x16xf32, #tpu.memory_space<vmem>>, vector<1x16xf32>
      %11 = vector.broadcast %9 : vector<16x1xf32> to vector<16x16xf32>
      %12 = vector.broadcast %10 : vector<1x16xf32> to vector<16x16xf32>
      %13 = arith.addf %11, %12 : vector<16x16xf32>
      %cst_9 = arith.constant 2.000000e+00 : f32
      %14 = vector.broadcast %cst_9 : f32 to vector<16x16xf32>
      %15 = arith.mulf %14, %8 : vector<16x16xf32>
      %16 = arith.subf %13, %15 : vector<16x16xf32>
      %cst_10 = arith.constant 0.000000e+00 : f32
      %17 = vector.broadcast %cst_10 : f32 to vector<16x16xf32>
      %18 = arith.maximumf %16, %17 : vector<16x16xf32>
      %c0_11 = arith.constant 0 : index
      %c0_12 = arith.constant 0 : index
      %19 = memref.load %arg2[%c0_11, %c0_12] : memref<1x1xf32, #tpu.memory_space<smem>>
      %20 = vector.broadcast %19 : f32 to vector<16x16xf32>
      %21 = arith.mulf %18, %20 : vector<16x16xf32>
      %22 = math.exp %21 : vector<16x16xf32>
      %23 = arith.mulf %22, %22 : vector<16x16xf32>
      %24 = arith.addf %22, %23 : vector<16x16xf32>
      %25 = arith.mulf %23, %23 : vector<16x16xf32>
      %26 = arith.addf %24, %25 : vector<16x16xf32>
      %27 = arith.mulf %25, %25 : vector<16x16xf32>
      %28 = arith.addf %26, %27 : vector<16x16xf32>
      %29 = arith.mulf %27, %27 : vector<16x16xf32>
      %30 = arith.addf %28, %29 : vector<16x16xf32>
      %c0_13 = arith.constant 0 : index
      %c0_14 = arith.constant 0 : index
      %31 = vector.load %arg5[%c0_13, %c0_14] : memref<1x16xf32, #tpu.memory_space<vmem>>, vector<1x16xf32>
      %cst_15 = arith.constant dense<0.000000e+00> : vector<1x16xf32>
      %32 = tpu.matmul %31, %30, %cst_15 {dimension_numbers = #tpu.dot_dimension_numbers<[1], [0], [0], [1], [0, 0, 1, 1], [], []>} : vector<1x16xf32>, vector<16x16xf32>, vector<1x16xf32> -> vector<1x16xf32>
      %c0_16 = arith.constant 0 : index
      %c0_17 = arith.constant 0 : index
      %33 = vector.load %arg6[%c0_16, %c0_17] : memref<1x16xf32, #tpu.memory_space<vmem>>, vector<1x16xf32>
      %34 = arith.mulf %32, %33 : vector<1x16xf32>
      %35 = arith.cmpi sgt, %arg1, %arg0 : i32
      %cst_18 = arith.constant 2.000000e+00 : f32
      %cst_19 = arith.constant 1.000000e+00 : f32
      %36 = arith.select %35, %cst_18, %cst_19 : f32
      %c0_20 = arith.constant 0 : index
      %c0_21 = arith.constant 0 : index
      %c0_22 = arith.constant 0 : index
      %37 = vector.load %arg9[%c0_20, %c0_21, %c0_22] : memref<1x1x16xf32, #tpu.memory_space<vmem>>, vector<1x1x16xf32>
      %38 = vector.broadcast %36 : f32 to vector<1x16xf32>
      %39 = arith.mulf %38, %34 : vector<1x16xf32>
      %40 = vector.shape_cast %39 : vector<1x16xf32> to vector<1x1x16xf32>
      %41 = arith.addf %37, %40 : vector<1x1x16xf32>
      %c0_23 = arith.constant 0 : index
      %c0_24 = arith.constant 0 : index
      %c0_25 = arith.constant 0 : index
      %42 = vector.load %arg9[%c0_23, %c0_24, %c0_25] : memref<1x1x16xf32, #tpu.memory_space<vmem>>, vector<1x1x16xf32>
      tpu.vector_store %arg9[%c0_23, %c0_24, %c0_25], %41 {strides = array<i32>} : memref<1x1x16xf32, #tpu.memory_space<vmem>>, vector<1x1x16xf32>,
    } else {
    }
    return
  }
  func.func @transform_0(%arg0: i32, %arg1: i32) -> (i32, i32) {
    %c0_i32 = arith.constant 0 : i32
    %c0_i32_0 = arith.constant 0 : i32
    %c0_i32_1 = arith.constant 0 : i32
    return %c0_i32, %c0_i32_0 : i32, i32
  }
  func.func @transform_1(%arg0: i32, %arg1: i32) -> (i32, i32) {
    %c0_i32 = arith.constant 0 : i32
    %c0_i32_0 = arith.constant 0 : i32
    return %arg0, %c0_i32 : i32, i32
  }
  func.func @transform_2(%arg0: i32, %arg1: i32) -> (i32, i32) {
    %0 = arith.maxsi %arg0, %arg1 : i32
    %c0_i32 = arith.constant 0 : i32
    %c0_i32_0 = arith.constant 0 : i32
    return %c0_i32, %0 : i32, i32
  }
  func.func @transform_3(%arg0: i32, %arg1: i32) -> (i32, i32) {
    %c0_i32 = arith.constant 0 : i32
    %c0_i32_0 = arith.constant 0 : i32
    return %c0_i32, %arg0 : i32, i32
  }
  func.func @transform_4(%arg0: i32, %arg1: i32) -> (i32, i32) {
    %0 = arith.maxsi %arg0, %arg1 : i32
    %c0_i32 = arith.constant 0 : i32
    %c0_i32_0 = arith.constant 0 : i32
    return %c0_i32, %0 : i32, i32
  }
  func.func @transform_5(%arg0: i32, %arg1: i32) -> (i32, i32) {
    %c0_i32 = arith.constant 0 : i32
    %c0_i32_0 = arith.constant 0 : i32
    return %arg0, %c0_i32 : i32, i32
  }
  func.func @transform_6(%arg0: i32, %arg1: i32) -> (i32, i32) {
    %0 = arith.maxsi %arg0, %arg1 : i32
    %c0_i32 = arith.constant 0 : i32
    %c0_i32_0 = arith.constant 0 : i32
    return %c0_i32, %0 : i32, i32
  }
  func.func @transform_7(%arg0: i32, %arg1: i32) -> (i32, i32, i32) {
    %c0_i32 = arith.constant 0 : i32
    %c0_i32_0 = arith.constant 0 : i32
    %c0_i32_1 = arith.constant 0 : i32
    return %arg0, %c0_i32, %c0_i32_0 : i32, i32, i32
  }
}

</mosaic_0001>

<llo_original>
// kernel: tpu_custom_call.1
$region0: #{tpu_custom_call.1}
  #allocation0 [shape = 'u32[]', space=smem, size = 0x4, offset = 0x4, fixed_abs, tag = 'smem constant byte address 0x4 - core index']
  #allocation1 [shape = 'u32[144,128]{1,0:T(1,128)}', space=vmem, size = 0x12000, scoped, tag = 'internal scratch']
  #allocation2 [shape = 'f32[1,1]{1,0:T(1,128)S(6)}', space=smem, size = 0x200, scoped, tag = 'scoped memory for tpu_custom_call.1']
  %s0 = inlined_call_operand.<no memory space> [shape: f32[1,1], index: 0, kind: input, shape index: {}]
  %s1 = inlined_call_operand.vmem [shape: f32[16,1], index: 1, kind: input, shape index: {}]
  %s2 = inlined_call_operand.vmem [shape: f32[1,16], index: 2, kind: input, shape index: {}]
  %s3 = inlined_call_operand.vmem [shape: f32[1,16], index: 3, kind: input, shape index: {}]
  %s4 = inlined_call_operand.vmem [shape: f32[1,16], index: 4, kind: input, shape index: {}]
  %s5 = inlined_call_operand.vmem [shape: f32[16,128], index: 5, kind: input, shape index: {}]
  %s6 = inlined_call_operand.vmem [shape: f32[128,16], index: 6, kind: input, shape index: {}]
  %s7 = inlined_call_operand.hbm [shape: f32[1,1,16], index: 7, kind: output, shape index: {}]
  %s8 = sld [smem:[#allocation0]]
  $region46: #{tpu_custom_call.1} parent=0
    _
  %s10 = ssub.s32 1, %s8
  %s11 = scalar_select 0, %s10, %s8
  %12 = sst [smem:[#allocation2]] %s0
  $region1: #{tpu_custom_call.1} parent=0
    #allocation3 [shape = 'u8[512]{0}', space=vmem, size = 0x400, scoped, tag = 'output window, operand 0, single buffered']
    #allocation4 [shape = 's32[1]{0}', space=sflag, size = 0x4, scoped, tag = 'scoped memory for tpu_custom_call.1']
    %13 = vsyncpa [#allocation4], 0
    // Predicated region
    $region2: #{tpu_custom_call.1} parent=1 // pred_check
      _
    $region3: #{tpu_custom_call.1} parent=1 // pred_check_branch
      %15 = sbr.rel (0) target = $region5
    $region4: #{tpu_custom_call.1} parent=1 // pred_region
      _
    $region5: #{tpu_custom_call.1} parent=1 // pred_fallthru
      _
    // Predicated region
    $region6: #{tpu_custom_call.1} parent=1 // pred_check
      _
    $region7: #{tpu_custom_call.1} parent=1 // pred_check_branch
      %17 = sbr.rel (0) target = $region9
    $region8: #{tpu_custom_call.1} parent=1 // pred_region
      _
    $region9: #{tpu_custom_call.1} parent=1 // pred_fallthru
      _
    // Predicated region
    $region10: #{tpu_custom_call.1} parent=1 // pred_check
      _
    $region11: #{tpu_custom_call.1} parent=1 // pred_check_branch
      %19 = sbr.rel (0) target = $region13
    $region12: #{tpu_custom_call.1} parent=1 // pred_region
      _
    $region13: #{tpu_custom_call.1} parent=1 // pred_fallthru
      _
    // Predicated region
    $region14: #{tpu_custom_call.1} parent=1 // pred_check
      _
    $region15: #{tpu_custom_call.1} parent=1 // pred_check_branch
      %21 = sbr.rel (0) target = $region17
    $region16: #{tpu_custom_call.1} parent=1 // pred_region
      _
    $region17: #{tpu_custom_call.1} parent=1 // pred_fallthru
      _
    // Predicated region
    $region18: #{tpu_custom_call.1} parent=1 // pred_check
      _
    $region19: #{tpu_custom_call.1} parent=1 // pred_check_branch
      %23 = sbr.rel (0) target = $region21
    $region20: #{tpu_custom_call.1} parent=1 // pred_region
      _
    $region21: #{tpu_custom_call.1} parent=1 // pred_fallthru
      _
    // Predicated region
    $region22: #{tpu_custom_call.1} parent=1 // pred_check
      _
    $region23: #{tpu_custom_call.1} parent=1 // pred_check_branch
      %25 = sbr.rel (0) target = $region25
    $region24: #{tpu_custom_call.1} parent=1 // pred_region
      _
    $region25: #{tpu_custom_call.1} parent=1 // pred_fallthru
      _
    // Predicated region
    $region26: #{tpu_custom_call.1} parent=1 // pred_check
      _
    $region27: #{tpu_custom_call.1} parent=1 // pred_check_branch
      %27 = sbr.rel (0) target = $region29
    $region28: #{tpu_custom_call.1} parent=1 // pred_region
      _
    $region29: #{tpu_custom_call.1} parent=1 // pred_fallthru
      _
    %p28 = scmp.eq.s32.totalorder 0, 0
    // Predicated region
    $region30: #{tpu_custom_call.1} parent=1 // pred_check
      %p29 = pneg %p28
    $region31: #{tpu_custom_call.1} parent=1 // pred_check_branch
      %31 = sbr.rel (%p29) target = $region33
    $region32: #{tpu_custom_call.1} parent=1 // pred_region
      %vm32 = vcmask 122880
      %33 = vst.msk [vmem:[#allocation3] sm:$0x1] %vm32, 0.0
    $region33: #{tpu_custom_call.1} parent=1 // pred_fallthru
      _
    %p34 = scmp.ge.s32.totalorder 0, 0
    // Predicated region
    $region34: #{tpu_custom_call.1} parent=1 // pred_check
      %p35 = pneg %p34
    $region35: #{tpu_custom_call.1} parent=1 // pred_check_branch
      %37 = sbr.rel (%p35) target = $region37
    $region36: #{tpu_custom_call.1} parent=1 // pred_region
      %v38 = vld [vmem:[%s5] sm:$0xff]
      %v39 = vld [vmem:[%s5 + $0x8] sm:$0xff]
      %v40 = vld [vmem:[%s6] sm:$0xff]
      %v41 = vld [vmem:[%s6 + $0x8] sm:$0xff]
      %v42 = vld [vmem:[%s6 + $0x10] sm:$0xff]
      %v43 = vld [vmem:[%s6 + $0x18] sm:$0xff]
      %v44 = vld [vmem:[%s6 + $0x20] sm:$0xff]
      %v45 = vld [vmem:[%s6 + $0x28] sm:$0xff]
      %v46 = vld [vmem:[%s6 + $0x30] sm:$0xff]
      %v47 = vld [vmem:[%s6 + $0x38] sm:$0xff]
      %v48 = vld [vmem:[%s6 + $0x40] sm:$0xff]
      %v49 = vld [vmem:[%s6 + $0x48] sm:$0xff]
      %v50 = vld [vmem:[%s6 + $0x50] sm:$0xff]
      %v51 = vld [vmem:[%s6 + $0x58] sm:$0xff]
      %v52 = vld [vmem:[%s6 + $0x60] sm:$0xff]
      %v53 = vld [vmem:[%s6 + $0x68] sm:$0xff]
      %v54 = vld [vmem:[%s6 + $0x70] sm:$0xff]
      %v55 = vld [vmem:[%s6 + $0x78] sm:$0xff]
      %56 = vmatprep.subr.mxu0 0.0
      %57 = vmatpush1.msra.mxu0 %v55
      %58 = vmatprep.subr.mxu0 0.0
      %59 = vmatpush1.msra.mxu0 %v54
      %60 = vmatprep.subr.mxu0 0.0
      %61 = vmatpush1.msra.mxu0 %v53
      %62 = vmatprep.subr.mxu0 0.0
      %63 = vmatpush1.msra.mxu0 %v52
      %64 = vmatprep.subr.mxu0 0.0
      %65 = vmatpush1.msra.mxu0 %v51
      %66 = vmatprep.subr.mxu0 0.0
      %67 = vmatpush1.msra.mxu0 %v50
      %68 = vmatprep.subr.mxu0 0.0
      %69 = vmatpush1.msra.mxu0 %v49
      %70 = vmatprep.subr.mxu0 0.0
      %71 = vmatpush1.msra.mxu0 %v48
      %72 = vmatprep.subr.mxu0 0.0
      %73 = vmatpush1.msra.mxu0 %v47
      %74 = vmatprep.subr.mxu0 0.0
      %75 = vmatpush1.msra.mxu0 %v46
      %76 = vmatprep.subr.mxu0 0.0
      %77 = vmatpush1.msra.mxu0 %v45
      %78 = vmatprep.subr.mxu0 0.0
      %79 = vmatpush1.msra.mxu0 %v44
      %80 = vmatprep.subr.mxu0 0.0
      %81 = vmatpush1.msra.mxu0 %v43
      %82 = vmatprep.subr.mxu0 0.0
      %83 = vmatpush1.msra.mxu0 %v42
      %84 = vmatprep.subr.mxu0 0.0
      %85 = vmatpush1.msra.mxu0 %v41
      %86 = vmatprep.subr.mxu0 0.0
      %87 = vmatpush1.msra.mxu0 %v40
      %88 = vmatprep.subr.mxu0 0.0
      %89 = vmatpush2.msra.mxu0 0.0
      %90 = vmatprep.subr.mxu0 0.0
      %91 = vmatpush2.msra.mxu0 0.0
      %92 = vmatprep.subr.mxu0 0.0
      %93 = vmatpush2.msra.mxu0 0.0
      %94 = vmatprep.subr.mxu0 0.0
      %95 = vmatpush2.msra.mxu0 0.0
      %96 = vmatprep.subr.mxu0 0.0
      %97 = vmatpush2.msra.mxu0 0.0
      %98 = vmatprep.subr.mxu0 0.0
      %99 = vmatpush2.msra.mxu0 0.0
      %100 = vmatprep.subr.mxu0 0.0
      %101 = vmatpush2.msra.mxu0 0.0
      %102 = vmatprep.subr.mxu0 0.0
      %103 = vmatpush2.msra.mxu0 0.0
      %104 = vmatprep.subr.mxu0 0.0
      %105 = vmatpush2.msra.mxu0 0.0
      %106 = vmatprep.subr.mxu0 0.0
      %107 = vmatpush2.msra.mxu0 0.0
      %108 = vmatprep.subr.mxu0 0.0
      %109 = vmatpush2.msra.mxu0 0.0
      %110 = vmatprep.subr.mxu0 0.0
      %111 = vmatpush2.msra.mxu0 0.0
      %112 = vmatprep.subr.mxu0 0.0
      %113 = vmatpush2.msra.mxu0 0.0
      %114 = vmatprep.subr.mxu0 0.0
      %115 = vmatpush2.msra.mxu0 0.0
      %116 = vmatprep.subr.mxu0 0.0
      %117 = vmatpush2.msra.mxu0 0.0
      %118 = vmatprep.subr.mxu0 0.0
      %119 = vmatpush2.msra.mxu0 0.0
      %120 = vmatprep.mubr.f32.mxu0 0.0
      %121 = vmatmul.mubr.f32.gmra.mxu0 %v38
      %v122 = vpop.f32.mrf.mxu0
      %v123 = vadd.f32 0.0, %v122
      %v124 = vpop.f32.mrf.mxu0
      %125 = vmatprep.mubr.f32.mxu0 0.0
      %126 = vmatmul.mubr.f32.gmra.mxu0 %v39
      %v127 = vpop.f32.mrf.mxu0
      %v128 = vadd.f32 0.0, %v127
      %v129 = vpop.f32.mrf.mxu0
      %130 = vdwg.mxu0
      %v131 = vld [vmem:[%s1] sm:$0xff]
      %v132 = vld [vmem:[%s1 + $0x8] sm:$0xff]
      %v133 = vld [vmem:[%s2] sm:$0x1]
      %135 = vset.pattern.permute.xlu0 0
      %136 = vperm.xlu0 %135, %v131
      %v137 = vpop.permute.xlu0 %136
      %140 = vset.pattern.permute.xlu0 0
      %141 = vperm.xlu0 %140, %v132
      %v142 = vpop.permute.xlu0 %141
      %v145 = vlaneseq
      %v146 = vshrl.u32 %v145, 7
      %v147 = vsub.s32 0, %v146
      %v148 = vrot.slane %v133, %v147
      %v150 = vadd.f32 %v137, %v148
      %v151 = vadd.f32 %v142, %v148
      %v152 = vmul.f32 %v123, 2.0
      %v153 = vmul.f32 %v128, 2.0
      %v154 = vsub.f32 %v150, %v152
      %v155 = vsub.f32 %v151, %v153
      %v156 = vmax.f32 %v154, 0.0
      %v157 = vmax.f32 %v155, 0.0
      %s158 = sld [smem:[#allocation2]]
      %v159 = vstv %s158
      %v160 = vmul.f32 %v156, %v159
      %v161 = vmul.f32 %v157, %v159
      %v162 = vmul.f32 %v160, 1.442695
      %v163 = vpow.pop %v162
      %v164 = vmul.f32 %v161, 1.442695
      %v165 = vpow.pop %v164
      %v166 = vmul.f32 %v163, %v163
      %v167 = vmul.f32 %v165, %v165
      %v168 = vadd.f32 %v163, %v166
      %v169 = vadd.f32 %v165, %v167
      %v170 = vmul.f32 %v166, %v166
      %v171 = vmul.f32 %v167, %v167
      %v172 = vadd.f32 %v168, %v170
      %v173 = vadd.f32 %v169, %v171
      %v174 = vmul.f32 %v170, %v170
      %v175 = vmul.f32 %v171, %v171
      %v176 = vadd.f32 %v172, %v174
      %v177 = vadd.f32 %v173, %v175
      %v178 = vmul.f32 %v174, %v174
      %v179 = vmul.f32 %v175, %v175
      %v180 = vadd.f32 %v176, %v178
      %v181 = vadd.f32 %v177, %v179
      %v182 = vld [vmem:[%s3] sm:$0x1]
      %vm183 = vcmask 130048
      %v185 = vsel %vm183, %v182, 0
      %187 = vmatprep.subr.mxu0 0.0
      %188 = vmatpush1.msra.mxu0 0.0
      %189 = vmatprep.subr.mxu0 0.0
      %190 = vmatpush1.msra.mxu0 0.0
      %191 = vmatprep.subr.mxu0 0.0
      %192 = vmatpush1.msra.mxu0 0.0
      %193 = vmatprep.subr.mxu0 0.0
      %194 = vmatpush1.msra.mxu0 0.0
      %195 = vmatprep.subr.mxu0 0.0
      %196 = vmatpush1.msra.mxu0 0.0
      %197 = vmatprep.subr.mxu0 0.0
      %198 = vmatpush1.msra.mxu0 0.0
      %199 = vmatprep.subr.mxu0 0.0
      %200 = vmatpush1.msra.mxu0 0.0
      %201 = vmatprep.subr.mxu0 0.0
      %202 = vmatpush1.msra.mxu0 0.0
      %203 = vmatprep.subr.mxu0 0.0
      %204 = vmatpush1.msra.mxu0 0.0
      %205 = vmatprep.subr.mxu0 0.0
      %206 = vmatpush1.msra.mxu0 0.0
      %207 = vmatprep.subr.mxu0 0.0
      %208 = vmatpush1.msra.mxu0 0.0
      %209 = vmatprep.subr.mxu0 0.0
      %210 = vmatpush1.msra.mxu0 0.0
      %211 = vmatprep.subr.mxu0 0.0
      %212 = vmatpush1.msra.mxu0 0.0
      %213 = vmatprep.subr.mxu0 0.0
      %214 = vmatpush1.msra.mxu0 0.0
      %215 = vmatprep.subr.mxu0 0.0
      %216 = vmatpush1.msra.mxu0 %v181
      %217 = vmatprep.subr.mxu0 0.0
      %218 = vmatpush1.msra.mxu0 %v180
      %219 = vmatprep.subr.mxu0 0.0
      %220 = vmatpush2.msra.mxu0 0.0
      %221 = vmatprep.subr.mxu0 0.0
      %222 = vmatpush2.msra.mxu0 0.0
      %223 = vmatprep.subr.mxu0 0.0
      %224 = vmatpush2.msra.mxu0 0.0
      %225 = vmatprep.subr.mxu0 0.0
      %226 = vmatpush2.msra.mxu0 0.0
      %227 = vmatprep.subr.mxu0 0.0
      %228 = vmatpush2.msra.mxu0 0.0
      %229 = vmatprep.subr.mxu0 0.0
      %230 = vmatpush2.msra.mxu0 0.0
      %231 = vmatprep.subr.mxu0 0.0
      %232 = vmatpush2.msra.mxu0 0.0
      %233 = vmatprep.subr.mxu0 0.0
      %234 = vmatpush2.msra.mxu0 0.0
      %235 = vmatprep.subr.mxu0 0.0
      %236 = vmatpush2.msra.mxu0 0.0
      %237 = vmatprep.subr.mxu0 0.0
      %238 = vmatpush2.msra.mxu0 0.0
      %239 = vmatprep.subr.mxu0 0.0
      %240 = vmatpush2.msra.mxu0 0.0
      %241 = vmatprep.subr.mxu0 0.0
      %242 = vmatpush2.msra.mxu0 0.0
      %243 = vmatprep.subr.mxu0 0.0
      %244 = vmatpush2.msra.mxu0 0.0
      %245 = vmatprep.subr.mxu0 0.0
      %246 = vmatpush2.msra.mxu0 0.0
      %247 = vmatprep.subr.mxu0 0.0
      %248 = vmatpush2.msra.mxu0 0.0
      %249 = vmatprep.subr.mxu0 0.0
      %250 = vmatpush2.msra.mxu0 0.0
      %251 = vmatprep.mubr.f32.mxu0 0.0
      %252 = vmatmul.mubr.f32.gmra.mxu0 %v185
      %v253 = vpop.f32.mrf.mxu0
      %v254 = vadd.f32 0.0, %v253
      %v255 = vpop.f32.mrf.mxu0
      %256 = vdwg.mxu0
      %v257 = vld [vmem:[%s4] sm:$0x1]
      %v258 = vmul.f32 %v254, %v257
      %p259 = scmp.gt.s32.totalorder 0, 0
      %s260 = scalar_select %p259, 2.0, 1.0
      %v261 = vld [vmem:[#allocation3] sm:$0x1]
      %v262 = vstv %s260
      %v263 = vmul.f32 %v262, %v258
      %v264 = vadd.f32 %v261, %v263
      %vm265 = vcmask 122880
      %266 = vst.msk [vmem:[#allocation3] sm:$0x1] %vm265, %v264
    $region37: #{tpu_custom_call.1} parent=1 // pred_fallthru
      _
    // Predicated region
    $region38: #{tpu_custom_call.1} parent=1 // pred_check
      _
    $region39: #{tpu_custom_call.1} parent=1 // pred_check_branch
      %268 = sbr.rel (0) target = $region41
    $region40: #{tpu_custom_call.1} parent=1 // pred_region
      %s270 = ssub.s32 16, 16
      %271 = vsyncadd [#allocation4], %s270
      %s273 = sshll.u32 [#allocation3], 4
      %s274 = int_to_ptr.vmem [resolvable:$true] %s273
      %276 = dma.vmem_to_hbm [thread:$0]  %s274, 16, %s7, [#allocation4]
    $region41: #{tpu_custom_call.1} parent=1 // pred_fallthru
      _
    // Predicated region
    $region42: #{tpu_custom_call.1} parent=1 // pred_check
      _
    $region43: #{tpu_custom_call.1} parent=1 // pred_check_branch
      %278 = sbr.rel (0) target = $region45
    $region44: #{tpu_custom_call.1} parent=1 // pred_region
      %279 = dma.done [#allocation4], 16
    $region45: #{tpu_custom_call.1} parent=1 // pred_fallthru
      _
    %280 = vsyncpa [#allocation4], 1

</llo_original>
